<compile_context>
chip_gen: v7x
topology: tpu7x:2x2x1
jax: 0.10.0
libtpu: 0.0.40
codegen_flags: <defaults>
</compile_context>

<pallas_src>
import functools

import jax
import jax.numpy as jnp
from jax.experimental import pallas as pl
from jax.experimental.pallas import tpu as pltpu

_LANE = 128
_MAX_BLOCK_ROWS = 4096   # (4096,128) f32 tile = 2 MiB; 2 inputs x 2 buffers = 8 MiB.


def _cdiv(a, b):
    return -(-a // b)


def _round_up(a, b):
    return _cdiv(a, b) * b


def _sublane_multiple(dtype):
    # Minimum sublane tiling per element width (f32: 8, bf16/f16: 16, int8: 32).
    return {4: 8, 2: 16, 1: 32}.get(jnp.dtype(dtype).itemsize, 8)


def _num_tensorcores():
    """Best-effort TensorCore count for the leading 'parallel' grid axis."""
    try:
        dev = jax.devices()[0]
        if dev.platform != "tpu":
            return 1
        kind = str(getattr(dev, "device_kind", "")).lower()
        # v5e / v6e expose one TensorCore per chip; v7x (and older megacore
        # parts) expose two behind one device. Defaulting to 2 is always
        # functionally correct (worst case: one duplicate, fully-masked block).
        if any(s in kind for s in ("v5 lite", "v5e", "v6 lite", "v6e", "v6")):
            return 1
        return 2
    except Exception:
        return 2


def _focal_loss_kernel(x_ref, t_ref, out_ref, acc_ref, *, gamma, pos_weight,
                       rows, block_rows, steps_per_core):
    """One (block_rows, 128) tile of focal loss + running (8,128) accumulation.

    x_ref, t_ref : (block_rows, 128) tiles in VMEM (any float / int8 dtype).
    out_ref      : (1, 1) f32 per-core partial sum in SMEM.
    acc_ref      : (8, 128) f32 VMEM scratch accumulator (per core).
    """
    c = pl.program_id(0)   # 'parallel' megacore axis
    j = pl.program_id(1)   # sequential reduction axis

    @pl.when(j == 0)
    def _():
        acc_ref[...] = jnp.zeros_like(acc_ref)

    x = x_ref[...].astype(jnp.float32)
    t = t_ref[...].astype(jnp.float32)

    # Numerically-stable BCE-with-logits, reusing e = exp(-|x|) for the sigmoid:
    #   ce      = max(x, 0) - x*t + log1p(e)
    #   sigmoid = 1/(1+e)       if x >= 0
    #           = 1 - 1/(1+e)   otherwise   (saves a multiply vs e/(1+e))
    e = jnp.exp(-jnp.abs(x))
    ce = jnp.maximum(x, 0.0) - x * t + jnp.log1p(e)
    d = 1.0 + e
    # EUP approximate reciprocal + two Newton steps: moves the divide off the
    # VALU (the slot nearest saturation for this HBM-bound kernel) while
    # keeping full f32 accuracy regardless of the hardware seed precision.
    r = pl.reciprocal(d, approx=True)
    r = r * (2.0 - d * r)
    inv = r * (2.0 - d * r)
    p = jnp.where(x >= 0.0, inv, 1.0 - inv)

    # 1 - p_t = 1 - (p*t + (1-p)(1-t)) = p + t - 2*p*t; clamp >= 0 so a
    # fractional gamma can never NaN from rounding noise.
    g = jnp.maximum(p + t - 2.0 * p * t, 0.0)

    gamma_f = float(gamma)
    if 0.0 <= gamma_f <= 8.0 and (2.0 * gamma_f).is_integer():
        k = int(gamma_f)
        if gamma_f == k:                      # integer gamma (default 2): g*g
            focal = jnp.ones_like(g) if k == 0 else g
            for _ in range(k - 1):
                focal = focal * g
        else:                                 # half-integer gamma: g^k * sqrt(g)
            focal = jnp.sqrt(g)
            for _ in range(k):
                focal = focal * g
    else:
        focal = g ** gamma_f                  # EUP exp+log path (rare)

    loss = ce * focal
    if float(pos_weight) != 1.0:
        loss = (1.0 + (float(pos_weight) - 1.0) * t) * loss

    # (block_rows, 128) -> (8, 128): layout-preserving reshape + VPU vreg adds;
    # the single expensive cross-lane reduce happens once per core at the end.
    def _partial(v):
        return jnp.sum(v.reshape(block_rows // 8, 8, _LANE), axis=0)

    blk = c * steps_per_core + j             # linear block id (unclamped)
    row0 = blk * block_rows                  # first row covered by this block
    is_full = (row0 + block_rows) <= rows    # fully in-bounds -> no masking

    @pl.when(is_full)
    def _():
        acc_ref[...] += _partial(loss)

    @pl.when(jnp.logical_not(is_full))
    def _():
        # Partial edge block or duplicate clamped block: mask whole rows (the
        # kernel only ever sees a 128-aligned prefix, so no per-lane masking).
        # The where() also kills NaN/garbage from the uninitialised tail of an
        # edge DMA.
        rows_i = jax.lax.broadcasted_iota(jnp.int32, (block_rows, _LANE), 0)
        acc_ref[...] += _partial(jnp.where(row0 + rows_i < rows, loss, 0.0))

    @pl.when(j == pl.num_programs(1) - 1)
    def _():
        out_ref[0, 0] = jnp.sum(acc_ref[...])


def _canonical_logits(x):
    # Keep native float dtypes (bf16 halves HBM traffic); cast anything else.
    return x if jnp.issubdtype(x.dtype, jnp.floating) else x.astype(jnp.float32)


def _canonical_targets(t):
    # Narrow integer / bool targets stream straight into the kernel (1 B/elem)
    # and are cast to f32 only after the DMA.
    if jnp.issubdtype(t.dtype, jnp.floating):
        return t
    if t.dtype == jnp.bool_:
        return t.astype(jnp.int8)
    if jnp.issubdtype(t.dtype, jnp.integer) and t.dtype.itemsize == 1:
        return t
    return t.astype(jnp.float32)


def _focal_elementwise(x, t, gamma, pos_weight):
    """Per-element sigmoid focal loss in plain jnp (reference / ragged tail)."""
    x = x.astype(jnp.float32)
    t = t.astype(jnp.float32)
    ce = jnp.maximum(x, 0.0) - x * t + jnp.log1p(jnp.exp(-jnp.abs(x)))
    p = jax.nn.sigmoid(x)
    p_t = p * t + (1.0 - p) * (1.0 - t)
    loss = ce * (1.0 - p_t) ** gamma
    if float(pos_weight) != 1.0:
        loss = (1.0 + (float(pos_weight) - 1.0) * t) * loss
    return loss


def _focal_sum_pallas(x2d, t2d, gamma, pos_weight):
    """Sum of focal loss over a lane-dense (rows, 128) slab via Pallas."""
    rows = x2d.shape[0]
    sub = max(_sublane_multiple(x2d.dtype), _sublane_multiple(t2d.dtype))
    block_rows = min(_MAX_BLOCK_ROWS, _round_up(rows, sub))
    nblk = _cdiv(rows, block_rows)
    ncores = max(1, min(_num_tensorcores(), nblk))
    steps = _cdiv(nblk, ncores)

    kernel = functools.partial(
        _focal_loss_kernel,
        gamma=float(gamma), pos_weight=float(pos_weight),
        rows=rows, block_rows=block_rows, steps_per_core=steps)

    def in_map(c, j):
        # Clamp so the DMA never targets a block past the array; out-of-range
        # (c, j) steps re-read the last block and are fully masked in-kernel.
        return (jnp.minimum(c * steps + j, nblk - 1), 0)

    tile = (block_rows, _LANE)
    n_elems = rows * _LANE
    cost = pl.CostEstimate(
        flops=25 * n_elems,
        transcendentals=3 * n_elems,
        bytes_accessed=int(x2d.nbytes) + int(t2d.nbytes) + 4 * ncores)

    partials = pl.pallas_call(
        kernel,
        out_shape=jax.ShapeDtypeStruct((ncores, 1), jnp.float32),
        grid=(ncores, steps),
        in_specs=[pl.BlockSpec(tile, in_map), pl.BlockSpec(tile, in_map)],
        out_specs=pl.BlockSpec((1, 1), lambda c, j: (c, 0),
                               memory_space=pltpu.SMEM),
        scratch_shapes=[pltpu.VMEM((8, _LANE), jnp.float32)],
        compiler_params=pltpu.CompilerParams(
            dimension_semantics=("parallel", "arbitrary")),
        cost_estimate=cost,
    )(x2d, t2d)

    # Combine the per-core partial sums (<= 2 scalars) on the XLA side.
    return jnp.sum(partials)


def sigmoid_focal_loss(inputs, targets, gamma=2.0, pos_weight=1.0,
                       smoothing=0.0, reduction="mean"):
    """JAX/Pallas equivalent of the PyTorch sigmoid_focal_loss."""
    if smoothing and float(smoothing) > 0.0:
        # TODO(synk): random label smoothing (torch.rand_like) not implemented;
        # would need pltpu.prng_* inside the kernel. Unused by FocalLoss.
        raise NotImplementedError("label smoothing not supported")
    if reduction not in ("mean", "sum"):
        # TODO(synk): reduction='none' (per-element loss output) is not wired
        # through this scalar-reduction kernel.
        raise NotImplementedError("only 'mean' and 'sum' reductions supported")

    n = int(inputs.size)
    if n == 0:
        return jnp.float32(jnp.nan) if reduction == "mean" else jnp.float32(0.0)

    x = _canonical_logits(jnp.ravel(inputs))
    t = _canonical_targets(jnp.ravel(targets))

    rows = n // _LANE
    n_main = rows * _LANE
    tail = n - n_main

    total = jnp.float32(0.0)
    if rows > 0:
        # The 128-aligned prefix goes through the Pallas kernel; when tail == 0
        # (the common case) ravel+reshape is metadata-only — no pad copy.
        x_main = (x if tail == 0 else x[:n_main]).reshape(rows, _LANE)
        t_main = (t if tail == 0 else t[:n_main]).reshape(rows, _LANE)
        total = _focal_sum_pallas(x_main, t_main, gamma, pos_weight)
    if tail > 0:
        # Ragged tail: < 128 elements, folded in with plain jnp instead of
        # pad-copying the whole flattened tensor.
        total = total + jnp.sum(
            _focal_elementwise(x[n_main:], t[n_main:], gamma, pos_weight))

    if reduction == "mean":
        return total * jnp.float32(1.0 / n)
    return total


class FocalLoss:
    """Focal loss for imbalanced binary classification (Pallas-backed).

    The reference PyTorch forward passes `self.reduction` positionally into
    the `smoothing` slot (an arg-order bug); we implement the intended
    semantics: smoothing = 0, reduction taken from the module.
    """

    def __init__(self, gamma: float = 2.0, pos_weight: float = 1.0,
                 reduction: str = "mean"):
        self.gamma = gamma
        self.pos_weight = pos_weight
        self.reduction = reduction

    def __call__(self, inputs, targets):
        return sigmoid_focal_loss(inputs, targets, gamma=self.gamma,
                                  pos_weight=self.pos_weight,
                                  smoothing=0.0, reduction=self.reduction)


def _focal_loss_ref(inputs, targets, gamma=2.0, pos_weight=1.0,
                    reduction="mean"):
    """Pure-JAX reference for correctness checking."""
    loss = _focal_elementwise(jnp.ravel(inputs), jnp.ravel(targets),
                              gamma, pos_weight)
    return jnp.mean(loss) if reduction == "mean" else jnp.sum(loss)


if __name__ == "__main__":
    key = jax.random.PRNGKey(0)
    ks = jax.random.split(key, 6)

    # 1) Small NCHW binary-classification head, default FocalLoss (gamma=2, mean).
    x = jax.random.normal(ks[0], (2, 4, 16, 16), dtype=jnp.float32)
    t = jax.random.bernoulli(ks[1], p=0.25, shape=(2, 4, 16, 16)).astype(jnp.float32)
    out = jax.block_until_ready(FocalLoss()(x, t))
    ref = _focal_loss_ref(x, t)
    assert jnp.allclose(out, ref, rtol=1e-5, atol=1e-6), (out, ref)

    # 2) Multi-block grid (rows > block_rows -> partial edge block, megacore
    #    split / multi-step accumulation), half-integer gamma, pos_weight, 'sum'.
    x2 = jax.random.normal(ks[2], (2, 4, 300, 300), dtype=jnp.float32)
    t2 = jax.random.bernoulli(ks[3], p=0.1, shape=(2, 4, 300, 300)).astype(jnp.float32)
    out2 = jax.block_until_ready(
        sigmoid_focal_loss(x2, t2, gamma=1.5, pos_weight=2.0, reduction="sum"))
    ref2 = _focal_loss_ref(x2, t2, gamma=1.5, pos_weight=2.0, reduction="sum")
    assert jnp.allclose(out2, ref2, rtol=1e-5, atol=1e-4), (out2, ref2)

    # 3) Ragged size (3-element tail handled outside the kernel) with bf16
    #    logits + int8 targets streamed at native width into the kernel.
    x3 = jax.random.normal(ks[4], (3, 5, 7, 11), dtype=jnp.bfloat16)
    t3 = jax.random.bernoulli(ks[5], p=0.3, shape=(3, 5, 7, 11)).astype(jnp.int8)
    out3 = jax.block_until_ready(sigmoid_focal_loss(x3, t3, reduction="mean"))
    ref3 = _focal_loss_ref(x3, t3, reduction="mean")
    assert jnp.allclose(out3, ref3, rtol=1e-5, atol=1e-6), (out3, ref3)

    print("KERNEL_OK")
</pallas_src>

<mosaic_0001>
module attributes {stable_mosaic.version = 11 : i64} {
  func.func @_focal_loss_kernel(%arg0: i32, %arg1: i32, %arg2: memref<16x128xf32, #tpu.memory_space<vmem>>, %arg3: memref<16x128xf32, #tpu.memory_space<vmem>>, %arg4: memref<1x1xf32, #tpu.memory_space<smem>>, %arg5: memref<8x128xf32, #tpu.memory_space<vmem>>) attributes {dimension_semantics = [#tpu.dimension_semantics<parallel>, #tpu.dimension_semantics<arbitrary>], iteration_bounds = array<i64: 1, 1>, scalar_prefetch = 0 : i64, scratch_operands = 1 : i64, tpu.core_type = #tpu.core_type<tc>, window_params = [{transform_indices = @transform_0, window_bounds = array<i64: 16, 128>}, {transform_indices = @transform_1, window_bounds = array<i64: 16, 128>}, {transform_indices = @transform_2, window_bounds = array<i64: 1, 1>}]} {
    %c0_i32 = arith.constant 0 : i32
    %0 = arith.cmpi eq, %arg1, %c0_i32 : i32
    %1 = arith.extui %0 : i1 to i32
    %c0_i32_0 = arith.constant 0 : i32
    %2 = arith.cmpi ne, %1, %c0_i32_0 : i32
    scf.if %2 {
      %cst_18 = arith.constant 0.000000e+00 : f32
      %53 = vector.broadcast %cst_18 : f32 to vector<8x128xf32>
      %c0_19 = arith.constant 0 : index
      %c0_20 = arith.constant 0 : index
      %54 = vector.load %arg5[%c0_19, %c0_20] : memref<8x128xf32, #tpu.memory_space<vmem>>, vector<8x128xf32>
      tpu.vector_store %arg5[%c0_19, %c0_20], %53 {strides = array<i32>} : memref<8x128xf32, #tpu.memory_space<vmem>>, vector<8x128xf32>,
    } else {
    }
    %c0 = arith.constant 0 : index
    %c0_1 = arith.constant 0 : index
    %3 = vector.load %arg2[%c0, %c0_1] : memref<16x128xf32, #tpu.memory_space<vmem>>, vector<16x128xf32>
    %c0_2 = arith.constant 0 : index
    %c0_3 = arith.constant 0 : index
    %4 = vector.load %arg3[%c0_2, %c0_3] : memref<16x128xf32, #tpu.memory_space<vmem>>, vector<16x128xf32>
    %5 = math.absf %3 : vector<16x128xf32>
    %cst = arith.constant 0.000000e+00 : f32
    %6 = vector.broadcast %cst : f32 to vector<16x128xf32>
    %7 = arith.subf %6, %5 : vector<16x128xf32>
    %8 = math.exp %7 : vector<16x128xf32>
    %cst_4 = arith.constant 0.000000e+00 : f32
    %9 = vector.broadcast %cst_4 : f32 to vector<16x128xf32>
    %10 = arith.maximumf %3, %9 : vector<16x128xf32>
    %11 = arith.mulf %3, %4 : vector<16x128xf32>
    %12 = arith.subf %10, %11 : vector<16x128xf32>
    %13 = math.log1p %8 : vector<16x128xf32>
    %14 = arith.addf %12, %13 : vector<16x128xf32>
    %cst_5 = arith.constant 1.000000e+00 : f32
    %15 = vector.broadcast %cst_5 : f32 to vector<16x128xf32>
    %16 = arith.addf %15, %8 : vector<16x128xf32>
    %17 = tpu.reciprocal %16 {approx = true} : vector<16x128xf32> -> vector<16x128xf32>
    %18 = arith.mulf %16, %17 : vector<16x128xf32>
    %cst_6 = arith.constant 2.000000e+00 : f32
    %19 = vector.broadcast %cst_6 : f32 to vector<16x128xf32>
    %20 = arith.subf %19, %18 : vector<16x128xf32>
    %21 = arith.mulf %17, %20 : vector<16x128xf32>
    %22 = arith.mulf %16, %21 : vector<16x128xf32>
    %cst_7 = arith.constant 2.000000e+00 : f32
    %23 = vector.broadcast %cst_7 : f32 to vector<16x128xf32>
    %24 = arith.subf %23, %22 : vector<16x128xf32>
    %25 = arith.mulf %21, %24 : vector<16x128xf32>
    %cst_8 = arith.constant 0.000000e+00 : f32
    %26 = vector.broadcast %cst_8 : f32 to vector<16x128xf32>
    %27 = arith.cmpf oge, %3, %26 : vector<16x128xf32>
    %cst_9 = arith.constant 1.000000e+00 : f32
    %28 = vector.broadcast %cst_9 : f32 to vector<16x128xf32>
    %29 = arith.subf %28, %25 : vector<16x128xf32>
    %30 = arith.select %27, %25, %29 : vector<16x128xi1>, vector<16x128xf32>
    %31 = arith.addf %30, %4 : vector<16x128xf32>
    %cst_10 = arith.constant 2.000000e+00 : f32
    %32 = vector.broadcast %cst_10 : f32 to vector<16x128xf32>
    %33 = arith.mulf %32, %30 : vector<16x128xf32>
    %34 = arith.mulf %33, %4 : vector<16x128xf32>
    %35 = arith.subf %31, %34 : vector<16x128xf32>
    %cst_11 = arith.constant 0.000000e+00 : f32
    %36 = vector.broadcast %cst_11 : f32 to vector<16x128xf32>
    %37 = arith.maximumf %35, %36 : vector<16x128xf32>
    %38 = arith.mulf %37, %37 : vector<16x128xf32>
    %39 = arith.mulf %14, %38 : vector<16x128xf32>
    %c1_i32 = arith.constant 1 : i32
    %40 = arith.muli %arg0, %c1_i32 : i32
    %41 = arith.addi %40, %arg1 : i32
    %c16_i32 = arith.constant 16 : i32
    %42 = arith.muli %41, %c16_i32 : i32
    %c16_i32_12 = arith.constant 16 : i32
    %43 = arith.addi %42, %c16_i32_12 : i32
    %c16_i32_13 = arith.constant 16 : i32
    %44 = arith.cmpi sle, %43, %c16_i32_13 : i32
    %45 = arith.extui %44 : i1 to i32
    %c0_i32_14 = arith.constant 0 : i32
    %46 = arith.cmpi ne, %45, %c0_i32_14 : i32
    scf.if %46 {
      %c0_18 = arith.constant 0 : index
      %c0_19 = arith.constant 0 : index
      %53 = vector.load %arg5[%c0_18, %c0_19] : memref<8x128xf32, #tpu.memory_space<vmem>>, vector<8x128xf32>
      %54 = vector.shape_cast %39 : vector<16x128xf32> to vector<2x8x128xf32>
      %cst_20 = arith.constant dense<0.000000e+00> : vector<8x128xf32>
      %55 = vector.multi_reduction <add>, %54, %cst_20 [0] : vector<2x8x128xf32> to vector<8x128xf32>
      %56 = arith.addf %53, %55 : vector<8x128xf32>
      %c0_21 = arith.constant 0 : index
      %c0_22 = arith.constant 0 : index
      %57 = vector.load %arg5[%c0_21, %c0_22] : memref<8x128xf32, #tpu.memory_space<vmem>>, vector<8x128xf32>
      tpu.vector_store %arg5[%c0_21, %c0_22], %56 {strides = array<i32>} : memref<8x128xf32, #tpu.memory_space<vmem>>, vector<8x128xf32>,
    } else {
    }
    %true = arith.constant true
    %47 = arith.xori %44, %true : i1
    %48 = arith.extui %47 : i1 to i32
    %c0_i32_15 = arith.constant 0 : i32
    %49 = arith.cmpi ne, %48, %c0_i32_15 : i32
    scf.if %49 {
      %53 = tpu.iota {dimensions = array<i32: 0>} : vector<16x128xi32>
      %c0_18 = arith.constant 0 : index
      %c0_19 = arith.constant 0 : index
      %54 = vector.load %arg5[%c0_18, %c0_19] : memref<8x128xf32, #tpu.memory_space<vmem>>, vector<8x128xf32>
      %55 = vector.broadcast %42 : i32 to vector<16x128xi32>
      %56 = arith.addi %55, %53 : vector<16x128xi32>
      %c16_i32_20 = arith.constant 16 : i32
      %57 = vector.broadcast %c16_i32_20 : i32 to vector<16x128xi32>
      %58 = arith.cmpi slt, %56, %57 : vector<16x128xi32>
      %cst_21 = arith.constant 0.000000e+00 : f32
      %59 = vector.broadcast %cst_21 : f32 to vector<16x128xf32>
      %60 = arith.select %58, %39, %59 : vector<16x128xi1>, vector<16x128xf32>
      %61 = vector.shape_cast %60 : vector<16x128xf32> to vector<2x8x128xf32>
      %cst_22 = arith.constant dense<0.000000e+00> : vector<8x128xf32>
      %62 = vector.multi_reduction <add>, %61, %cst_22 [0] : vector<2x8x128xf32> to vector<8x128xf32>
      %63 = arith.addf %54, %62 : vector<8x128xf32>
      %c0_23 = arith.constant 0 : index
      %c0_24 = arith.constant 0 : index
      %64 = vector.load %arg5[%c0_23, %c0_24] : memref<8x128xf32, #tpu.memory_space<vmem>>, vector<8x128xf32>
      tpu.vector_store %arg5[%c0_23, %c0_24], %63 {strides = array<i32>} : memref<8x128xf32, #tpu.memory_space<vmem>>, vector<8x128xf32>,
    } else {
    }
    %c0_i32_16 = arith.constant 0 : i32
    %50 = arith.cmpi eq, %arg1, %c0_i32_16 : i32
    %51 = arith.extui %50 : i1 to i32
    %c0_i32_17 = arith.constant 0 : i32
    %52 = arith.cmpi ne, %51, %c0_i32_17 : i32
    scf.if %52 {
      %c0_18 = arith.constant 0 : index
      %c0_19 = arith.constant 0 : index
      %53 = vector.load %arg5[%c0_18, %c0_19] : memref<8x128xf32, #tpu.memory_space<vmem>>, vector<8x128xf32>
      %54 = vector.shape_cast %53 : vector<8x128xf32> to vector<1x8x128xf32>
      %cst_20 = arith.constant dense<0.000000e+00> : vector<1xf32>
      %55 = vector.multi_reduction <add>, %54, %cst_20 [1, 2] : vector<1x8x128xf32> to vector<1xf32>
      %56 = vector.shape_cast %55 : vector<1xf32> to vector<1x1x1xf32>
      %57 = vector.extract %56[0, 0, 0] : f32 from vector<1x1x1xf32>
      %c0_21 = arith.constant 0 : index
      %c0_22 = arith.constant 0 : index
      %58 = memref.load %arg4[%c0_21, %c0_22] : memref<1x1xf32, #tpu.memory_space<smem>>
      memref.store %57, %arg4[%c0_21, %c0_22] : memref<1x1xf32, #tpu.memory_space<smem>>
    } else {
    }
    return
  }
  func.func @transform_0(%arg0: i32, %arg1: i32) -> (i32, i32) {
    %c1_i32 = arith.constant 1 : i32
    %0 = arith.muli %arg0, %c1_i32 : i32
    %1 = arith.addi %0, %arg1 : i32
    %c0_i32 = arith.constant 0 : i32
    %2 = arith.minsi %1, %c0_i32 : i32
    %c0_i32_0 = arith.constant 0 : i32
    %c0_i32_1 = arith.constant 0 : i32
    return %2, %c0_i32_0 : i32, i32
  }
  func.func @transform_1(%arg0: i32, %arg1: i32) -> (i32, i32) {
    %c1_i32 = arith.constant 1 : i32
    %0 = arith.muli %arg0, %c1_i32 : i32
    %1 = arith.addi %0, %arg1 : i32
    %c0_i32 = arith.constant 0 : i32
    %2 = arith.minsi %1, %c0_i32 : i32
    %c0_i32_0 = arith.constant 0 : i32
    %c0_i32_1 = arith.constant 0 : i32
    return %2, %c0_i32_0 : i32, i32
  }
  func.func @transform_2(%arg0: i32, %arg1: i32) -> (i32, i32) {
    %c0_i32 = arith.constant 0 : i32
    %c0_i32_0 = arith.constant 0 : i32
    return %arg0, %c0_i32 : i32, i32
  }
}

</mosaic_0001>

<llo_original>
// kernel: tpu_custom_call.1
$region0: #{tpu_custom_call.1}
  #allocation0 [shape = 'u32[]', space=smem, size = 0x4, offset = 0x4, fixed_abs, tag = 'smem constant byte address 0x4 - core index']
  #allocation1 [shape = 'u32[144,128]{1,0:T(1,128)}', space=vmem, size = 0x12000, scoped, tag = 'internal scratch']
  #allocation2 [shape = 'f32[8,128]{1,0:T(8,128)}', space=vmem, size = 0x1000, scoped, tag = 'scratch operand']
  %s0 = inlined_call_operand.hbm [shape: f32[16,128], index: 0, kind: input, shape index: {}]
  %s1 = inlined_call_operand.hbm [shape: f32[16,128], index: 1, kind: input, shape index: {}]
  %s2 = inlined_call_operand.hbm [shape: f32[1,1], index: 2, kind: output, shape index: {}]
  %s3 = sld [smem:[#allocation0]]
  $region42: #{tpu_custom_call.1} parent=0
    _
  %s5 = ssub.s32 1, %s3
  %s6 = scalar_select 0, %s5, %s3
  $region1: #{tpu_custom_call.1} parent=0
    #allocation3 [shape = 'u8[8192]{0}', space=vmem, size = 0x2000, scoped, tag = 'input window, operand 0, single buffered']
    #allocation4 [shape = 's32[1]{0}', space=sflag, size = 0x4, scoped, tag = 'scoped memory for tpu_custom_call.1']
    #allocation5 [shape = 's32[1]{0}', space=sflag, size = 0x4, scoped, tag = 'scoped memory for tpu_custom_call.1']
    #allocation6 [shape = 'u8[8192]{0}', space=vmem, size = 0x2000, scoped, tag = 'input window, operand 1, single buffered']
    #allocation7 [shape = 's32[1]{0}', space=sflag, size = 0x4, scoped, tag = 'scoped memory for tpu_custom_call.1']
    #allocation8 [shape = 'u8[512]{0}', space=smem, size = 0x200, scoped, tag = 'output window, operand 0, single buffered']
    %7 = vsyncpa [#allocation4], 0
    %8 = vsyncpa [#allocation7], 0
    %9 = vsyncpa [#allocation5], 0
    // Predicated region
    $region2: #{tpu_custom_call.1} parent=1 // pred_check
      _
    $region3: #{tpu_custom_call.1} parent=1 // pred_check_branch
      %11 = sbr.rel (0) target = $region5
    $region4: #{tpu_custom_call.1} parent=1 // pred_region
      %s12 = sadd.s32 0, 0
      %p13 = scmp.lt.s32.totalorder %s12, 0
      %s14 = scalar_select %p13, %s12, 0
      %s15 = smul.u32 2, %s14
      %s17 = ssub.s32 256, 256
      %18 = vsyncadd [#allocation4], %s17
      %s19 = smul.addr %s15, 128
      %s20 = scalar_lea.hbm %s0, %s19
      %s21 = sshll.u32 [#allocation3], 4
      %s22 = int_to_ptr.vmem [resolvable:$true] %s21
      %27 = dma.hbm_to_vmem [thread:$0]  %s20, 256, %s22, [#allocation4], 128, 128, 8
    $region5: #{tpu_custom_call.1} parent=1 // pred_fallthru
      _
    // Predicated region
    $region6: #{tpu_custom_call.1} parent=1 // pred_check
      _
    $region7: #{tpu_custom_call.1} parent=1 // pred_check_branch
      %29 = sbr.rel (0) target = $region9
    $region8: #{tpu_custom_call.1} parent=1 // pred_region
      %s30 = sadd.s32 0, 0
      %p31 = scmp.lt.s32.totalorder %s30, 0
      %s32 = scalar_select %p31, %s30, 0
      %s33 = smul.u32 2, %s32
      %s35 = ssub.s32 256, 256
      %36 = vsyncadd [#allocation7], %s35
      %s37 = smul.addr %s33, 128
      %s38 = scalar_lea.hbm %s1, %s37
      %s39 = sshll.u32 [#allocation6], 4
      %s40 = int_to_ptr.vmem [resolvable:$true] %s39
      %45 = dma.hbm_to_vmem [thread:$0]  %s38, 256, %s40, [#allocation7], 128, 128, 8
    $region9: #{tpu_custom_call.1} parent=1 // pred_fallthru
      _
    // Predicated region
    $region10: #{tpu_custom_call.1} parent=1 // pred_check
      _
    $region11: #{tpu_custom_call.1} parent=1 // pred_check_branch
      %47 = sbr.rel (0) target = $region13
    $region12: #{tpu_custom_call.1} parent=1 // pred_region
      %48 = dma.done [#allocation4], 256
    $region13: #{tpu_custom_call.1} parent=1 // pred_fallthru
      _
    // Predicated region
    $region14: #{tpu_custom_call.1} parent=1 // pred_check
      _
    $region15: #{tpu_custom_call.1} parent=1 // pred_check_branch
      %50 = sbr.rel (0) target = $region17
    $region16: #{tpu_custom_call.1} parent=1 // pred_region
      %51 = dma.done [#allocation7], 256
    $region17: #{tpu_custom_call.1} parent=1 // pred_fallthru
      _
    %s52 = sadd.s32 0, 0
    %p53 = scmp.lt.s32.totalorder %s52, 0
    %s54 = scalar_select %p53, %s52, 0
    %s55 = smul.u32 2, %s54
    %s56 = sadd.s32 0, 0
    %p57 = scmp.lt.s32.totalorder %s56, 0
    %s58 = scalar_select %p57, %s56, 0
    %s59 = smul.u32 2, %s58
    %p60 = scmp.eq.s32.totalorder 0, 0
    // Predicated region
    $region18: #{tpu_custom_call.1} parent=1 // pred_check
      %p61 = pneg %p60
    $region19: #{tpu_custom_call.1} parent=1 // pred_check_branch
      %63 = sbr.rel (%p61) target = $region21
    $region20: #{tpu_custom_call.1} parent=1 // pred_region
      %64 = vst [vmem:[#allocation2] sm:$0xff] 0.0
    $region21: #{tpu_custom_call.1} parent=1 // pred_fallthru
      _
    %v65 = vld [vmem:[#allocation3] sm:$0xff]
    %v66 = vld [vmem:[#allocation3 + $0x8] sm:$0xff]
    %v67 = vld [vmem:[#allocation6] sm:$0xff]
    %v68 = vld [vmem:[#allocation6 + $0x8] sm:$0xff]
    %v69 = vand.u32 2147483647, %v65
    %v70 = vand.u32 2147483647, %v66
    %v71 = vsub.f32 0.0, %v69
    %v72 = vsub.f32 0.0, %v70
    %v73 = vmul.f32 %v71, 1.442695
    %v74 = vpow.pop %v73
    %v75 = vmul.f32 %v72, 1.442695
    %v76 = vpow.pop %v75
    %v77 = vmax.f32 %v65, 0.0
    %v78 = vmax.f32 %v66, 0.0
    %v79 = vmul.f32 %v65, %v67
    %v80 = vmul.f32 %v66, %v68
    %v81 = vsub.f32 %v77, %v79
    %v82 = vsub.f32 %v78, %v80
    %v83 = vadd.f32 %v74, 1.0
    %v84 = vlog2.pop %v83
    %v85 = vmul.f32 %v84, 0.6931472
    %v86 = vmul.f32 -0.5, %v74
    %v87 = vadd.f32 %v86, 1.0
    %v88 = vmul.f32 %v87, %v74
    %v89 = vand.u32 2147483647, %v74
    %vm90 = vcmp.lt.f32.partialorder %v89, 0.0004427343
    %v91 = vsel %vm90, %v88, %v85
    %v92 = vadd.f32 %v76, 1.0
    %v93 = vlog2.pop %v92
    %v94 = vmul.f32 %v93, 0.6931472
    %v95 = vmul.f32 -0.5, %v76
    %v96 = vadd.f32 %v95, 1.0
    %v97 = vmul.f32 %v96, %v76
    %v98 = vand.u32 2147483647, %v76
    %vm99 = vcmp.lt.f32.partialorder %v98, 0.0004427343
    %v100 = vsel %vm99, %v97, %v94
    %v101 = vadd.f32 %v81, %v91
    %v102 = vadd.f32 %v82, %v100
    %v103 = vadd.f32 %v74, 1.0
    %v104 = vadd.f32 %v76, 1.0
    %v105 = vrcp.pop %v103
    %v106 = vrcp.pop %v104
    %v107 = vmul.f32 %v103, %v105
    %v108 = vmul.f32 %v104, %v106
    %v109 = vsub.f32 2.0, %v107
    %v110 = vsub.f32 2.0, %v108
    %v111 = vmul.f32 %v105, %v109
    %v112 = vmul.f32 %v106, %v110
    %v113 = vmul.f32 %v103, %v111
    %v114 = vmul.f32 %v104, %v112
    %v115 = vsub.f32 2.0, %v113
    %v116 = vsub.f32 2.0, %v114
    %v117 = vmul.f32 %v111, %v115
    %v118 = vmul.f32 %v112, %v116
    %vm119 = vcmp.ge.f32.partialorder %v65, 0.0
    %vm120 = vcmp.ge.f32.partialorder %v66, 0.0
    %v121 = vsub.f32 1.0, %v117
    %v122 = vsub.f32 1.0, %v118
    %v123 = vsel %vm119, %v117, %v121
    %v124 = vsel %vm120, %v118, %v122
    %v125 = vadd.f32 %v123, %v67
    %v126 = vadd.f32 %v124, %v68
    %v127 = vmul.f32 %v123, 2.0
    %v128 = vmul.f32 %v124, 2.0
    %v129 = vmul.f32 %v127, %v67
    %v130 = vmul.f32 %v128, %v68
    %v131 = vsub.f32 %v125, %v129
    %v132 = vsub.f32 %v126, %v130
    %v133 = vmax.f32 %v131, 0.0
    %v134 = vmax.f32 %v132, 0.0
    %v135 = vmul.f32 %v133, %v133
    %v136 = vmul.f32 %v134, %v134
    %v137 = vmul.f32 %v101, %v135
    %v138 = vmul.f32 %v102, %v136
    %s139 = sadd.s32 0, 0
    %s140 = smul.u32 %s139, 16
    %s141 = sadd.s32 %s140, 16
    %p142 = scmp.le.s32.totalorder %s141, 16
    // Predicated region
    $region22: #{tpu_custom_call.1} parent=1 // pred_check
      %p143 = pneg %p142
    $region23: #{tpu_custom_call.1} parent=1 // pred_check_branch
      %145 = sbr.rel (%p143) target = $region25
    $region24: #{tpu_custom_call.1} parent=1 // pred_region
      %v146 = vld [vmem:[#allocation2] sm:$0xff]
      %v147 = vadd.f32 %v137, %v138
      %v148 = vadd.f32 %v146, %v147
      %149 = vst [vmem:[#allocation2] sm:$0xff] %v148
    $region25: #{tpu_custom_call.1} parent=1 // pred_fallthru
      _
    %p150 = scmp.gt.s32.totalorder %s141, 16
    // Predicated region
    $region26: #{tpu_custom_call.1} parent=1 // pred_check
      %p151 = pneg %p150
    $region27: #{tpu_custom_call.1} parent=1 // pred_check_branch
      %153 = sbr.rel (%p151) target = $region29
    $region28: #{tpu_custom_call.1} parent=1 // pred_region
      %v154 = vlaneseq
      %v155 = vshrl.u32 %v154, 7
      %v156 = vadd.s32 %v155, 8
      %v157 = vld [vmem:[#allocation2] sm:$0xff]
      %v158 = vstv %s140
      %v159 = vadd.s32 %v158, %v155
      %v160 = vadd.s32 %v158, %v156
      %vm161 = vcmp.lt.s32.totalorder %v159, 16
      %vm162 = vcmp.lt.s32.totalorder %v160, 16
      %v163 = vsel %vm161, %v137, 0.0
      %v164 = vsel %vm162, %v138, 0.0
      %v165 = vadd.f32 %v163, %v164
      %v166 = vadd.f32 %v157, %v165
      %167 = vst [vmem:[#allocation2] sm:$0xff] %v166
    $region29: #{tpu_custom_call.1} parent=1 // pred_fallthru
      _
    // Predicated region
    $region30: #{tpu_custom_call.1} parent=1 // pred_check
      %p168 = pneg %p60
    $region31: #{tpu_custom_call.1} parent=1 // pred_check_branch
      %170 = sbr.rel (%p168) target = $region33
    $region32: #{tpu_custom_call.1} parent=1 // pred_region
      %v171 = vld [vmem:[#allocation2] sm:$0xff]
      %172 = vadd.xlane.f32.xlu0 %v171
      %v173 = vpop.xlane.xlu0 %172
      %v174 = vrot.slane %v173, 4
      %v175 = vadd.f32 %v173, %v174
      %v176 = vrot.slane %v175, 2
      %v177 = vadd.f32 %v175, %v176
      %v178 = vrot.slane %v177, 1
      %v179 = vadd.f32 %v177, %v178
      %s180 = vtos %v179
      %s181 = scalar_lea.smem [#allocation8], 0
      %182 = sst [smem:[%s181]] %s180
    $region33: #{tpu_custom_call.1} parent=1 // pred_fallthru
      _
    // Predicated region
    $region34: #{tpu_custom_call.1} parent=1 // pred_check
      _
    $region35: #{tpu_custom_call.1} parent=1 // pred_check_branch
      %184 = sbr.rel (0) target = $region37
    $region36: #{tpu_custom_call.1} parent=1 // pred_region
      %s186 = ssub.s32 16, 16
      %187 = vsyncadd [#allocation5], %s186
      %190 = dma.smem_to_hbm [#allocation8], 16, %s2, [#allocation5]
    $region37: #{tpu_custom_call.1} parent=1 // pred_fallthru
      _
    // Predicated region
    $region38: #{tpu_custom_call.1} parent=1 // pred_check
      _
    $region39: #{tpu_custom_call.1} parent=1 // pred_check_branch
      %192 = sbr.rel (0) target = $region41
    $region40: #{tpu_custom_call.1} parent=1 // pred_region
      %193 = dma.done [#allocation5], 16
    $region41: #{tpu_custom_call.1} parent=1 // pred_fallthru
      _
    %194 = sfence
    %195 = vsyncpa [#allocation4], 1
    %196 = vsyncpa [#allocation7], 1
    %197 = vsyncpa [#allocation5], 1

</llo_original>
